<compile_context>
chip_gen: v7x
topology: tpu7x:2x2x1
jax: 0.10.0
libtpu: 0.0.40
codegen_flags: <defaults>
</compile_context>

<pallas_src>
import jax
import jax.numpy as jnp
from jax.experimental import pallas as pl
from jax.experimental.pallas import tpu as pltpu


def _round_up(n: int, m: int) -> int:
    return ((n + m - 1) // m) * m


def _vmem_capacity_bytes() -> int:
    # Per-core VMEM (128 MiB on v5e/v6e, 64 MiB on v7x). Conservative fallback.
    try:
        return int(pltpu.get_tpu_info().vmem_capacity_bytes)
    except Exception:
        return 64 * 1024 * 1024


def amplifier_kernel(x_ref, w_ref, b_ref, o_ref):
    # x_ref: (TB, 63) VMEM (input dtype)   w_ref: (1, 63) f32 VMEM (resident)
    # b_ref: (1, 1) f32 SMEM               o_ref: (TB, 1) f32 VMEM
    x = x_ref[...].astype(jnp.float32)          # per-tile cast on the VPU (free)
    w = w_ref[...]
    # Fused matvec: VPU multiply + XLU lane reduction (no N=1 MXU matmul).
    y = jnp.sum(x * w, axis=-1, keepdims=True)  # (TB, 1) f32
    y = y + b_ref[0, 0]
    # nn.Threshold(threshold=0, value=0.0001): y if y > 0 else 1e-4
    o_ref[...] = jnp.where(y > 0.0, y, jnp.float32(1e-4)).astype(o_ref.dtype)


def amplifier_forward(x, w1, b1, w2, b2, *, block_b=None):
    """x: (B, 63); w1: (63,128); b1: (128,); w2: (128,1); b2: (1,)."""
    B, K = x.shape

    # Algebraic fusion of the two Linears (no nonlinearity between them).
    w_row = jnp.dot(w1, w2).reshape(1, K).astype(jnp.float32)          # (1, 63)
    b_eff = (jnp.dot(b1, w2) + b2).reshape(1, 1).astype(jnp.float32)   # (1, 1)

    # --- Generation-aware tile sizing -------------------------------------
    # Double-buffered VMEM bytes per batch row: input tile (63 -> 128 lanes)
    # plus output tile ((tb,1) pads to 128 lanes of f32).
    in_row = 2 * 128 * jnp.dtype(x.dtype).itemsize
    out_row = 2 * 128 * 4
    per_row = in_row + out_row

    cap = _vmem_capacity_bytes()
    budget = cap // 2                           # leave headroom for scratch
    tb_cap = min(32768, max(8, ((budget - (1 << 20)) // per_row) // 8 * 8))

    tb = min(tb_cap, _round_up(B, 8))           # never bigger than needed
    if block_b is not None:                     # explicit override (tests)
        tb = min(tb, max(8, (block_b // 8) * 8))
    grid = pl.cdiv(B, tb)                       # boundary block handles B % tb

    vmem_limit = max(32 * 1024 * 1024,
                     min(cap - (8 << 20), per_row * tb + (8 << 20)))

    out = pl.pallas_call(
        amplifier_kernel,
        out_shape=jax.ShapeDtypeStruct((B, 1), jnp.float32),
        grid=(grid,),
        in_specs=[
            pl.BlockSpec((tb, K), lambda i: (i, 0)),             # x tiles (pipelined)
            pl.BlockSpec((1, K), lambda i: (0, 0)),              # fused weight (resident)
            pl.BlockSpec(memory_space=pltpu.MemorySpace.SMEM),   # scalar bias in SMEM
        ],
        out_specs=pl.BlockSpec((tb, 1), lambda i: (i, 0)),
        compiler_params=pltpu.CompilerParams(
            # Batch tiles are independent -> shard across v7x's 2 TensorCores.
            dimension_semantics=("parallel",),
            vmem_limit_bytes=int(vmem_limit),
        ),
    )(x, w_row, b_eff)
    return out


def amplifier_reference(x, w1, b1, w2, b2):
    # Original (un-fused) two-layer forward, for validation.
    h = x @ w1 + b1
    y = h @ w2 + b2
    return jnp.where(y > 0.0, y, 0.0001)


if __name__ == "__main__":
    key = jax.random.PRNGKey(0)
    kx, kp, kx2 = jax.random.split(key, 3)

    # torch.nn.Linear-style U(-1/sqrt(fan_in), 1/sqrt(fan_in)) init.
    k1, k2, k3, k4 = jax.random.split(kp, 4)
    lim1 = 1.0 / jnp.sqrt(63.0)
    lim2 = 1.0 / jnp.sqrt(128.0)
    w1 = jax.random.uniform(k1, (63, 128), jnp.float32, -lim1, lim1)
    b1 = jax.random.uniform(k2, (128,), jnp.float32, -lim1, lim1)
    w2 = jax.random.uniform(k3, (128, 1), jnp.float32, -lim2, lim2)
    b2 = jax.random.uniform(k4, (1,), jnp.float32, -lim2, lim2)

    # Primary small case (B=8, feature dim 63 as implied by Linear(63, 128)).
    x_small = jax.random.normal(kx, (8, 63), dtype=jnp.float32)
    out_small = amplifier_forward(x_small, w1, b1, w2, b2)
    jax.block_until_ready(out_small)
    ref_small = amplifier_reference(x_small, w1, b1, w2, b2)
    assert out_small.shape == (8, 1)
    assert jnp.allclose(out_small, ref_small, atol=2e-4, rtol=2e-4)

    # Larger case with the auto-sized (single) tile.
    x_big = jax.random.normal(kx2, (600, 63), dtype=jnp.float32)
    ref_big = amplifier_reference(x_big, w1, b1, w2, b2)
    out_big = amplifier_forward(x_big, w1, b1, w2, b2)
    jax.block_until_ready(out_big)
    assert out_big.shape == (600, 1)
    assert jnp.allclose(out_big, ref_big, atol=2e-4, rtol=2e-4)

    # Forced small tile: exercises the multi-step pipelined grid AND the
    # boundary block (600 % 128 != 0) with no wrapper-side padding.
    out_tiled = amplifier_forward(x_big, w1, b1, w2, b2, block_b=128)
    jax.block_until_ready(out_tiled)
    assert out_tiled.shape == (600, 1)
    assert jnp.allclose(out_tiled, ref_big, atol=2e-4, rtol=2e-4)

    print("KERNEL_OK")
</pallas_src>

<mosaic_0001>
module attributes {stable_mosaic.version = 11 : i64} {
  func.func @amplifier_kernel(%arg0: i32, %arg1: memref<8x63xf32, #tpu.memory_space<vmem>>, %arg2: memref<1x63xf32, #tpu.memory_space<vmem>>, %arg3: memref<1x1xf32, #tpu.memory_space<smem>>, %arg4: memref<8x1xf32, #tpu.memory_space<vmem>>) attributes {dimension_semantics = [#tpu.dimension_semantics<parallel>], iteration_bounds = array<i64: 1>, scalar_prefetch = 0 : i64, scratch_operands = 0 : i64, tpu.core_type = #tpu.core_type<tc>, window_params = [{transform_indices = @transform_0, window_bounds = array<i64: 8, 63>}, {pipeline_mode = #tpu.pipeline_mode<synchronous>, transform_indices = @transform_1, window_bounds = array<i64: 1, 63>}, {transform_indices = @transform_2, window_bounds = array<i64: 1, 1>}, {transform_indices = @transform_3, window_bounds = array<i64: 8, 1>}]} {
    %c0 = arith.constant 0 : index
    %c0_0 = arith.constant 0 : index
    %0 = vector.load %arg1[%c0, %c0_0] : memref<8x63xf32, #tpu.memory_space<vmem>>, vector<8x63xf32>
    %c0_1 = arith.constant 0 : index
    %c0_2 = arith.constant 0 : index
    %1 = vector.load %arg2[%c0_1, %c0_2] : memref<1x63xf32, #tpu.memory_space<vmem>>, vector<1x63xf32>
    %2 = vector.broadcast %1 : vector<1x63xf32> to vector<8x63xf32>
    %3 = arith.mulf %0, %2 : vector<8x63xf32>
    %cst = arith.constant dense<0.000000e+00> : vector<8xf32>
    %4 = vector.multi_reduction <add>, %3, %cst [1] : vector<8x63xf32> to vector<8xf32>
    %5 = vector.shape_cast %4 : vector<8xf32> to vector<8x1xf32>
    %c0_3 = arith.constant 0 : index
    %c0_4 = arith.constant 0 : index
    %6 = memref.load %arg3[%c0_3, %c0_4] : memref<1x1xf32, #tpu.memory_space<smem>>
    %7 = vector.broadcast %6 : f32 to vector<8x1xf32>
    %8 = arith.addf %5, %7 : vector<8x1xf32>
    %cst_5 = arith.constant 0.000000e+00 : f32
    %9 = vector.broadcast %cst_5 : f32 to vector<8x1xf32>
    %10 = arith.cmpf ogt, %8, %9 : vector<8x1xf32>
    %cst_6 = arith.constant 9.99999974E-5 : f32
    %11 = vector.broadcast %cst_6 : f32 to vector<8x1xf32>
    %12 = arith.select %10, %8, %11 : vector<8x1xi1>, vector<8x1xf32>
    %c0_7 = arith.constant 0 : index
    %c0_8 = arith.constant 0 : index
    %13 = vector.load %arg4[%c0_7, %c0_8] : memref<8x1xf32, #tpu.memory_space<vmem>>, vector<8x1xf32>
    tpu.vector_store %arg4[%c0_7, %c0_8], %12 {strides = array<i32>} : memref<8x1xf32, #tpu.memory_space<vmem>>, vector<8x1xf32>,
    return
  }
  func.func @transform_0(%arg0: i32) -> (i32, i32) {
    %c0_i32 = arith.constant 0 : i32
    %c0_i32_0 = arith.constant 0 : i32
    return %arg0, %c0_i32 : i32, i32
  }
  func.func @transform_1(%arg0: i32) -> (i32, i32) {
    %c0_i32 = arith.constant 0 : i32
    %c0_i32_0 = arith.constant 0 : i32
    %c0_i32_1 = arith.constant 0 : i32
    return %c0_i32, %c0_i32_0 : i32, i32
  }
  func.func @transform_2(%arg0: i32) -> (i32, i32) {
    %c0_i32 = arith.constant 0 : i32
    %c0_i32_0 = arith.constant 0 : i32
    %c0_i32_1 = arith.constant 0 : i32
    return %c0_i32, %c0_i32_0 : i32, i32
  }
  func.func @transform_3(%arg0: i32) -> (i32, i32) {
    %c0_i32 = arith.constant 0 : i32
    %c0_i32_0 = arith.constant 0 : i32
    return %arg0, %c0_i32 : i32, i32
  }
}

</mosaic_0001>

<llo_original>
// kernel: tpu_custom_call.1
$region0: #{tpu_custom_call.1}
  #allocation0 [shape = 'u32[]', space=smem, size = 0x4, offset = 0x4, fixed_abs, tag = 'smem constant byte address 0x4 - core index']
  #allocation1 [shape = 'u32[144,128]{1,0:T(1,128)}', space=vmem, size = 0x12000, scoped, tag = 'internal scratch']
  #allocation2 [shape = 'f32[1,1]{1,0:T(1,128)S(6)}', space=smem, size = 0x200, scoped, tag = 'scoped memory for tpu_custom_call.1']
  %s0 = inlined_call_operand.hbm [shape: f32[8,63], index: 0, kind: input, shape index: {}]
  %s1 = inlined_call_operand.vmem [shape: f32[1,63], index: 1, kind: input, shape index: {}]
  %s2 = inlined_call_operand.<no memory space> [shape: f32[1,1], index: 2, kind: input, shape index: {}]
  %s3 = inlined_call_operand.vmem [shape: f32[8,1], index: 3, kind: output, shape index: {}]
  %s4 = sld [smem:[#allocation0]]
  $region26: #{tpu_custom_call.1} parent=0
    _
  %s6 = ssub.s32 1, %s4
  %s7 = scalar_select 0, %s6, %s4
  %8 = sst [smem:[#allocation2]] %s2
  $region1: #{tpu_custom_call.1} parent=0
    #allocation3 [shape = 'u8[4096]{0}', space=vmem, size = 0x1000, scoped, tag = 'input window, operand 0, single buffered']
    #allocation4 [shape = 's32[1]{0}', space=sflag, size = 0x4, scoped, tag = 'scoped memory for tpu_custom_call.1']
    %9 = vsyncpa [#allocation4], 0
    // Predicated region
    $region2: #{tpu_custom_call.1} parent=1 // pred_check
      _
    $region3: #{tpu_custom_call.1} parent=1 // pred_check_branch
      %11 = sbr.rel (0) target = $region5
    $region4: #{tpu_custom_call.1} parent=1 // pred_region
      %s13 = ssub.s32 128, 128
      %14 = vsyncadd [#allocation4], %s13
      %s16 = sshll.u32 [#allocation3], 4
      %s17 = int_to_ptr.vmem [resolvable:$true] %s16
      %19 = dma.hbm_to_vmem [thread:$0]  %s0, 128, %s17, [#allocation4]
    $region5: #{tpu_custom_call.1} parent=1 // pred_fallthru
      _
    // Predicated region
    $region6: #{tpu_custom_call.1} parent=1 // pred_check
      _
    $region7: #{tpu_custom_call.1} parent=1 // pred_check_branch
      %21 = sbr.rel (0) target = $region9
    $region8: #{tpu_custom_call.1} parent=1 // pred_region
      _
    $region9: #{tpu_custom_call.1} parent=1 // pred_fallthru
      _
    // Predicated region
    $region10: #{tpu_custom_call.1} parent=1 // pred_check
      _
    $region11: #{tpu_custom_call.1} parent=1 // pred_check_branch
      %23 = sbr.rel (0) target = $region13
    $region12: #{tpu_custom_call.1} parent=1 // pred_region
      _
    $region13: #{tpu_custom_call.1} parent=1 // pred_fallthru
      _
    // Predicated region
    $region14: #{tpu_custom_call.1} parent=1 // pred_check
      _
    $region15: #{tpu_custom_call.1} parent=1 // pred_check_branch
      %25 = sbr.rel (0) target = $region17
    $region16: #{tpu_custom_call.1} parent=1 // pred_region
      %26 = dma.done [#allocation4], 128
    $region17: #{tpu_custom_call.1} parent=1 // pred_fallthru
      _
    %v27 = vld [vmem:[#allocation3] sm:$0xff]
    %v28 = vld [vmem:[%s1] sm:$0x1]
    %v30 = vlaneseq
    %v31 = vshrl.u32 %v30, 7
    %v32 = vsub.s32 0, %v31
    %v33 = vrot.slane %v28, %v32
    %v35 = vmul.f32 %v27, %v33
    %vm36 = vcmask 515072
    %v37 = vsel %vm36, %v35, 0.0
    %38 = vadd.xlane.f32.xlu0 %v37
    %v39 = vpop.xlane.xlu0 %38
    %s40 = sld [smem:[#allocation2]]
    %v41 = vstv %s40
    %v42 = vadd.f32 %v39, %v41
    %vm43 = vcmp.gt.f32.partialorder %v42, 0.0
    %v44 = vsel %vm43, %v42, 0.0001
    %vm45 = vcmask 7168
    %46 = vst.msk [vmem:[%s3] sm:$0xff] %vm45, %v44
    // Predicated region
    $region18: #{tpu_custom_call.1} parent=1 // pred_check
      _
    $region19: #{tpu_custom_call.1} parent=1 // pred_check_branch
      %48 = sbr.rel (0) target = $region21
    $region20: #{tpu_custom_call.1} parent=1 // pred_region
      _
    $region21: #{tpu_custom_call.1} parent=1 // pred_fallthru
      _
    // Predicated region
    $region22: #{tpu_custom_call.1} parent=1 // pred_check
      _
    $region23: #{tpu_custom_call.1} parent=1 // pred_check_branch
      %50 = sbr.rel (0) target = $region25
    $region24: #{tpu_custom_call.1} parent=1 // pred_region
      _
    $region25: #{tpu_custom_call.1} parent=1 // pred_fallthru
      _
    %51 = vsyncpa [#allocation4], 1

</llo_original>
